<compile_context>
chip_gen: v7x
topology: tpu7x:2x2x1
jax: 0.10.0
libtpu: 0.0.40
codegen_flags: <defaults>
</compile_context>

<pallas_src>
import jax
import jax.numpy as jnp
from jax.experimental import pallas as pl
from jax.experimental.pallas import tpu as pltpu

HIDDEN = 100   # logical hidden width (matches the PyTorch module)
F_PAD = 128    # lane-dense padding for state / action / output features
H_PAD = 128    # lane-dense padding for the hidden layer (100 -> 128)


def _residual_mlp_kernel(state_ref, action_ref,
                         w1s_ref, w1a_ref, b1_ref,
                         w2_ref, b2_ref,
                         w3_ref, b3_ref,
                         out_ref):
    """One (TB, 128) batch tile of:  out = state + MLP([state, action])."""
    state_f32 = state_ref[...]                        # (TB, F_PAD) f32, zero-padded lanes
    s_bf = state_f32.astype(jnp.bfloat16)
    a_bf = action_ref[...]                            # (TB, F_PAD) bf16

    # lin1 (split state/action weight blocks -> no concat needed) + ReLU
    h1 = (jnp.dot(s_bf, w1s_ref[...], preferred_element_type=jnp.float32)
          + jnp.dot(a_bf, w1a_ref[...], preferred_element_type=jnp.float32)
          + b1_ref[...])
    h1 = jnp.maximum(h1, 0.0)

    # lin2 + ReLU
    h2 = jnp.dot(h1.astype(jnp.bfloat16), w2_ref[...],
                 preferred_element_type=jnp.float32) + b2_ref[...]
    h2 = jnp.maximum(h2, 0.0)

    # lin3 (delta) + residual skip (padded lanes of w3/b3/state are zero -> out pad lanes = 0)
    delta = jnp.dot(h2.astype(jnp.bfloat16), w3_ref[...],
                    preferred_element_type=jnp.float32) + b3_ref[...]
    out_ref[...] = (delta + state_f32).astype(out_ref.dtype)


def init_params(key, state_dim, action_dim, hidden=HIDDEN):
    """Deterministic init matching nn.Linear's U(-1/sqrt(fan_in), 1/sqrt(fan_in))."""
    def linear(key, fan_in, fan_out):
        kw, kb = jax.random.split(key)
        bound = 1.0 / jnp.sqrt(fan_in)
        w = jax.random.uniform(kw, (fan_in, fan_out), jnp.float32, -bound, bound)
        b = jax.random.uniform(kb, (1, fan_out), jnp.float32, -bound, bound)
        return w, b

    k1, k2, k3 = jax.random.split(key, 3)
    w1, b1 = linear(k1, state_dim + action_dim, hidden)
    w2, b2 = linear(k2, hidden, hidden)
    w3, b3 = linear(k3, hidden, state_dim)
    return {"w1": w1, "b1": b1, "w2": w2, "b2": b2, "w3": w3, "b3": b3}


def pack_params(params, state_dim, action_dim):
    """Pad params to lane/MXU-aligned shapes and cast matmul operands to bf16 (done once)."""
    def pad2(x, rows, cols):
        return jnp.pad(x, ((0, rows - x.shape[0]), (0, cols - x.shape[1])))

    w1 = params["w1"]                                         # (sd+ad, HIDDEN)
    return {
        "w1s": pad2(w1[:state_dim], F_PAD, H_PAD).astype(jnp.bfloat16),
        "w1a": pad2(w1[state_dim:], F_PAD, H_PAD).astype(jnp.bfloat16),
        "b1":  pad2(params["b1"], 1, H_PAD).astype(jnp.float32),
        "w2":  pad2(params["w2"], H_PAD, H_PAD).astype(jnp.bfloat16),
        "b2":  pad2(params["b2"], 1, H_PAD).astype(jnp.float32),
        "w3":  pad2(params["w3"], H_PAD, F_PAD).astype(jnp.bfloat16),
        "b3":  pad2(params["b3"], 1, F_PAD).astype(jnp.float32),
        "state_dim": state_dim,
        "action_dim": action_dim,
    }


def residual_dynamics_forward(state, action, packed, *, block_b=256,
                              min_pallas_batch=128, force_pallas=False):
    """state: (..., state_dim), action: (..., action_dim) -> (..., state_dim)."""
    state_dim = packed["state_dim"]
    action_dim = packed["action_dim"]
    lead = state.shape[:-1]
    out_dtype = state.dtype

    state2d = state.reshape(-1, state_dim).astype(jnp.float32)
    action2d = action.reshape(-1, action_dim).astype(jnp.float32)
    B = state2d.shape[0]

    # Tiny flattened batches: a fused XLA graph beats kernel launch + DMA setup.
    if B < min_pallas_batch and not force_pallas:
        h = jnp.maximum(state2d @ packed["w1s"][:state_dim].astype(jnp.float32)
                        + action2d @ packed["w1a"][:action_dim].astype(jnp.float32)
                        + packed["b1"], 0.0)
        h = jnp.maximum(h @ packed["w2"].astype(jnp.float32) + packed["b2"], 0.0)
        delta = (h @ packed["w3"].astype(jnp.float32) + packed["b3"])[:, :state_dim]
        return (state2d + delta).astype(out_dtype).reshape(*lead, state_dim)

    # ---- Pallas path: pad batch to a multiple of the tile, features to 128 lanes ----
    grid_b = pl.cdiv(B, block_b)
    pb = grid_b * block_b

    state_p = jnp.zeros((pb, F_PAD), jnp.float32).at[:B, :state_dim].set(state2d)
    action_p = jnp.zeros((pb, F_PAD), jnp.bfloat16).at[:B, :action_dim].set(
        action2d.astype(jnp.bfloat16))

    flops = 2 * pb * (2 * F_PAD * H_PAD + H_PAD * H_PAD + H_PAD * F_PAD)
    bytes_accessed = (
        state_p.size * 4 + action_p.size * 2 + pb * F_PAD * 4
        + sum(packed[k].size * 2 for k in ("w1s", "w1a", "w2", "w3"))
        + sum(packed[k].size * 4 for k in ("b1", "b2", "b3")))

    out_p = pl.pallas_call(
        _residual_mlp_kernel,
        out_shape=jax.ShapeDtypeStruct((pb, F_PAD), jnp.float32),
        grid=(grid_b,),
        in_specs=[
            pl.BlockSpec((block_b, F_PAD), lambda i: (i, 0)),   # state tile (pipelined)
            pl.BlockSpec((block_b, F_PAD), lambda i: (i, 0)),   # action tile (pipelined)
            pl.BlockSpec((F_PAD, H_PAD), lambda i: (0, 0)),     # W1 state rows (resident)
            pl.BlockSpec((F_PAD, H_PAD), lambda i: (0, 0)),     # W1 action rows (resident)
            pl.BlockSpec((1, H_PAD), lambda i: (0, 0)),         # b1
            pl.BlockSpec((H_PAD, H_PAD), lambda i: (0, 0)),     # W2
            pl.BlockSpec((1, H_PAD), lambda i: (0, 0)),         # b2
            pl.BlockSpec((H_PAD, F_PAD), lambda i: (0, 0)),     # W3
            pl.BlockSpec((1, F_PAD), lambda i: (0, 0)),         # b3
        ],
        out_specs=pl.BlockSpec((block_b, F_PAD), lambda i: (i, 0)),
        compiler_params=pltpu.CompilerParams(
            dimension_semantics=("parallel",),      # shard batch tiles across v7x's 2 TCs
            vmem_limit_bytes=32 * 1024 * 1024),
        cost_estimate=pl.CostEstimate(
            flops=flops, transcendentals=0, bytes_accessed=bytes_accessed),
    )(state_p, action_p,
      packed["w1s"], packed["w1a"], packed["b1"],
      packed["w2"], packed["b2"],
      packed["w3"], packed["b3"])

    out = out_p[:B, :state_dim].astype(out_dtype)
    return out.reshape(*lead, state_dim)


def reference_forward(state, action, params):
    """Plain-JAX f32 reference matching the PyTorch module."""
    sa = jnp.concatenate([state, action], axis=-1)
    h = jnp.maximum(sa @ params["w1"] + params["b1"][0], 0.0)
    h = jnp.maximum(h @ params["w2"] + params["b2"][0], 0.0)
    delta = h @ params["w3"] + params["b3"][0]
    return state + delta


if __name__ == "__main__":
    key = jax.random.PRNGKey(0)
    kp, ks, ka = jax.random.split(key, 3)

    state_dim, action_dim, batch = 3, 3, 200
    params = init_params(kp, state_dim, action_dim)
    packed = pack_params(params, state_dim, action_dim)

    state = jax.random.normal(ks, (batch, state_dim), jnp.float32)
    action = jax.random.normal(ka, (batch, action_dim), jnp.float32)

    # block_b=128 with batch=200 -> 2 grid steps, exercising tiling + ragged tail padding.
    out = residual_dynamics_forward(state, action, packed,
                                    block_b=128, force_pallas=True)
    out = jax.block_until_ready(out)

    ref = reference_forward(state, action, params)
    assert out.shape == (batch, state_dim)
    # bf16 MXU operands (f32 accumulation) -> slightly looser tolerance vs f32 reference.
    assert jnp.allclose(out, ref, atol=5e-2, rtol=5e-2), "mismatch vs reference"

    print("KERNEL_OK")
</pallas_src>

<mosaic_0001>
module attributes {stable_mosaic.version = 11 : i64} {
  func.func @_residual_mlp_kernel(%arg0: i32, %arg1: memref<128x128xf32, #tpu.memory_space<vmem>>, %arg2: memref<128x128xbf16, #tpu.memory_space<vmem>>, %arg3: memref<128x128xbf16, #tpu.memory_space<vmem>>, %arg4: memref<128x128xbf16, #tpu.memory_space<vmem>>, %arg5: memref<1x128xf32, #tpu.memory_space<vmem>>, %arg6: memref<128x128xbf16, #tpu.memory_space<vmem>>, %arg7: memref<1x128xf32, #tpu.memory_space<vmem>>, %arg8: memref<128x128xbf16, #tpu.memory_space<vmem>>, %arg9: memref<1x128xf32, #tpu.memory_space<vmem>>, %arg10: memref<128x128xf32, #tpu.memory_space<vmem>>) attributes {dimension_semantics = [#tpu.dimension_semantics<parallel>], iteration_bounds = array<i64: 2>, scalar_prefetch = 0 : i64, scratch_operands = 0 : i64, tpu.core_type = #tpu.core_type<tc>, window_params = [{transform_indices = @transform_0, window_bounds = array<i64: 128, 128>}, {transform_indices = @transform_1, window_bounds = array<i64: 128, 128>}, {pipeline_mode = #tpu.pipeline_mode<synchronous>, transform_indices = @transform_2, window_bounds = array<i64: 128, 128>}, {pipeline_mode = #tpu.pipeline_mode<synchronous>, transform_indices = @transform_3, window_bounds = array<i64: 128, 128>}, {pipeline_mode = #tpu.pipeline_mode<synchronous>, transform_indices = @transform_4, window_bounds = array<i64: 1, 128>}, {pipeline_mode = #tpu.pipeline_mode<synchronous>, transform_indices = @transform_5, window_bounds = array<i64: 128, 128>}, {pipeline_mode = #tpu.pipeline_mode<synchronous>, transform_indices = @transform_6, window_bounds = array<i64: 1, 128>}, {pipeline_mode = #tpu.pipeline_mode<synchronous>, transform_indices = @transform_7, window_bounds = array<i64: 128, 128>}, {pipeline_mode = #tpu.pipeline_mode<synchronous>, transform_indices = @transform_8, window_bounds = array<i64: 1, 128>}, {transform_indices = @transform_9, window_bounds = array<i64: 128, 128>}]} {
    %c0 = arith.constant 0 : index
    %c0_0 = arith.constant 0 : index
    %0 = vector.load %arg1[%c0, %c0_0] : memref<128x128xf32, #tpu.memory_space<vmem>>, vector<128x128xf32>
    %1 = arith.truncf %0 : vector<128x128xf32> to vector<128x128xbf16>
    %c0_1 = arith.constant 0 : index
    %c0_2 = arith.constant 0 : index
    %2 = vector.load %arg2[%c0_1, %c0_2] : memref<128x128xbf16, #tpu.memory_space<vmem>>, vector<128x128xbf16>
    %c0_3 = arith.constant 0 : index
    %c0_4 = arith.constant 0 : index
    %3 = vector.load %arg3[%c0_3, %c0_4] : memref<128x128xbf16, #tpu.memory_space<vmem>>, vector<128x128xbf16>
    %cst = arith.constant dense<0.000000e+00> : vector<128x128xf32>
    %4 = tpu.matmul %1, %3, %cst {dimension_numbers = #tpu.dot_dimension_numbers<[1], [0], [0], [1], [0, 0, 1, 1], [], []>} : vector<128x128xbf16>, vector<128x128xbf16>, vector<128x128xf32> -> vector<128x128xf32>
    %c0_5 = arith.constant 0 : index
    %c0_6 = arith.constant 0 : index
    %5 = vector.load %arg4[%c0_5, %c0_6] : memref<128x128xbf16, #tpu.memory_space<vmem>>, vector<128x128xbf16>
    %cst_7 = arith.constant dense<0.000000e+00> : vector<128x128xf32>
    %6 = tpu.matmul %2, %5, %cst_7 {dimension_numbers = #tpu.dot_dimension_numbers<[1], [0], [0], [1], [0, 0, 1, 1], [], []>} : vector<128x128xbf16>, vector<128x128xbf16>, vector<128x128xf32> -> vector<128x128xf32>
    %7 = arith.addf %4, %6 : vector<128x128xf32>
    %c0_8 = arith.constant 0 : index
    %c0_9 = arith.constant 0 : index
    %8 = vector.load %arg5[%c0_8, %c0_9] : memref<1x128xf32, #tpu.memory_space<vmem>>, vector<1x128xf32>
    %9 = vector.broadcast %8 : vector<1x128xf32> to vector<128x128xf32>
    %10 = arith.addf %7, %9 : vector<128x128xf32>
    %cst_10 = arith.constant 0.000000e+00 : f32
    %11 = vector.broadcast %cst_10 : f32 to vector<128x128xf32>
    %12 = arith.maximumf %10, %11 : vector<128x128xf32>
    %13 = arith.truncf %12 : vector<128x128xf32> to vector<128x128xbf16>
    %c0_11 = arith.constant 0 : index
    %c0_12 = arith.constant 0 : index
    %14 = vector.load %arg6[%c0_11, %c0_12] : memref<128x128xbf16, #tpu.memory_space<vmem>>, vector<128x128xbf16>
    %cst_13 = arith.constant dense<0.000000e+00> : vector<128x128xf32>
    %15 = tpu.matmul %13, %14, %cst_13 {dimension_numbers = #tpu.dot_dimension_numbers<[1], [0], [0], [1], [0, 0, 1, 1], [], []>} : vector<128x128xbf16>, vector<128x128xbf16>, vector<128x128xf32> -> vector<128x128xf32>
    %c0_14 = arith.constant 0 : index
    %c0_15 = arith.constant 0 : index
    %16 = vector.load %arg7[%c0_14, %c0_15] : memref<1x128xf32, #tpu.memory_space<vmem>>, vector<1x128xf32>
    %17 = vector.broadcast %16 : vector<1x128xf32> to vector<128x128xf32>
    %18 = arith.addf %15, %17 : vector<128x128xf32>
    %cst_16 = arith.constant 0.000000e+00 : f32
    %19 = vector.broadcast %cst_16 : f32 to vector<128x128xf32>
    %20 = arith.maximumf %18, %19 : vector<128x128xf32>
    %21 = arith.truncf %20 : vector<128x128xf32> to vector<128x128xbf16>
    %c0_17 = arith.constant 0 : index
    %c0_18 = arith.constant 0 : index
    %22 = vector.load %arg8[%c0_17, %c0_18] : memref<128x128xbf16, #tpu.memory_space<vmem>>, vector<128x128xbf16>
    %cst_19 = arith.constant dense<0.000000e+00> : vector<128x128xf32>
    %23 = tpu.matmul %21, %22, %cst_19 {dimension_numbers = #tpu.dot_dimension_numbers<[1], [0], [0], [1], [0, 0, 1, 1], [], []>} : vector<128x128xbf16>, vector<128x128xbf16>, vector<128x128xf32> -> vector<128x128xf32>
    %c0_20 = arith.constant 0 : index
    %c0_21 = arith.constant 0 : index
    %24 = vector.load %arg9[%c0_20, %c0_21] : memref<1x128xf32, #tpu.memory_space<vmem>>, vector<1x128xf32>
    %25 = vector.broadcast %24 : vector<1x128xf32> to vector<128x128xf32>
    %26 = arith.addf %23, %25 : vector<128x128xf32>
    %27 = arith.addf %26, %0 : vector<128x128xf32>
    %c0_22 = arith.constant 0 : index
    %c0_23 = arith.constant 0 : index
    %28 = vector.load %arg10[%c0_22, %c0_23] : memref<128x128xf32, #tpu.memory_space<vmem>>, vector<128x128xf32>
    tpu.vector_store %arg10[%c0_22, %c0_23], %27 {strides = array<i32>} : memref<128x128xf32, #tpu.memory_space<vmem>>, vector<128x128xf32>,
    return
  }
  func.func @transform_0(%arg0: i32) -> (i32, i32) {
    %c0_i32 = arith.constant 0 : i32
    %c0_i32_0 = arith.constant 0 : i32
    return %arg0, %c0_i32 : i32, i32
  }
  func.func @transform_1(%arg0: i32) -> (i32, i32) {
    %c0_i32 = arith.constant 0 : i32
    %c0_i32_0 = arith.constant 0 : i32
    return %arg0, %c0_i32 : i32, i32
  }
  func.func @transform_2(%arg0: i32) -> (i32, i32) {
    %c0_i32 = arith.constant 0 : i32
    %c0_i32_0 = arith.constant 0 : i32
    %c0_i32_1 = arith.constant 0 : i32
    return %c0_i32, %c0_i32_0 : i32, i32
  }
  func.func @transform_3(%arg0: i32) -> (i32, i32) {
    %c0_i32 = arith.constant 0 : i32
    %c0_i32_0 = arith.constant 0 : i32
    %c0_i32_1 = arith.constant 0 : i32
    return %c0_i32, %c0_i32_0 : i32, i32
  }
  func.func @transform_4(%arg0: i32) -> (i32, i32) {
    %c0_i32 = arith.constant 0 : i32
    %c0_i32_0 = arith.constant 0 : i32
    %c0_i32_1 = arith.constant 0 : i32
    return %c0_i32, %c0_i32_0 : i32, i32
  }
  func.func @transform_5(%arg0: i32) -> (i32, i32) {
    %c0_i32 = arith.constant 0 : i32
    %c0_i32_0 = arith.constant 0 : i32
    %c0_i32_1 = arith.constant 0 : i32
    return %c0_i32, %c0_i32_0 : i32, i32
  }
  func.func @transform_6(%arg0: i32) -> (i32, i32) {
    %c0_i32 = arith.constant 0 : i32
    %c0_i32_0 = arith.constant 0 : i32
    %c0_i32_1 = arith.constant 0 : i32
    return %c0_i32, %c0_i32_0 : i32, i32
  }
  func.func @transform_7(%arg0: i32) -> (i32, i32) {
    %c0_i32 = arith.constant 0 : i32
    %c0_i32_0 = arith.constant 0 : i32
    %c0_i32_1 = arith.constant 0 : i32
    return %c0_i32, %c0_i32_0 : i32, i32
  }
  func.func @transform_8(%arg0: i32) -> (i32, i32) {
    %c0_i32 = arith.constant 0 : i32
    %c0_i32_0 = arith.constant 0 : i32
    %c0_i32_1 = arith.constant 0 : i32
    return %c0_i32, %c0_i32_0 : i32, i32
  }
  func.func @transform_9(%arg0: i32) -> (i32, i32) {
    %c0_i32 = arith.constant 0 : i32
    %c0_i32_0 = arith.constant 0 : i32
    return %arg0, %c0_i32 : i32, i32
  }
}

</mosaic_0001>

<llo_original>
// kernel: tpu_custom_call.1
$region0: #{tpu_custom_call.1}
  #allocation0 [shape = 'u32[]', space=smem, size = 0x4, offset = 0x4, fixed_abs, tag = 'smem constant byte address 0x4 - core index']
  #allocation1 [shape = 'u32[144,128]{1,0:T(1,128)}', space=vmem, size = 0x12000, scoped, tag = 'internal scratch']
  %s0 = inlined_call_operand.hbm [shape: f32[256,128], index: 0, kind: input, shape index: {}]
  %s1 = inlined_call_operand.hbm [shape: bf16[256,128], index: 1, kind: input, shape index: {}]
  %s2 = inlined_call_operand.hbm [shape: bf16[128,128], index: 2, kind: input, shape index: {}]
  %s3 = inlined_call_operand.hbm [shape: bf16[128,128], index: 3, kind: input, shape index: {}]
  %s4 = inlined_call_operand.vmem [shape: f32[1,128], index: 4, kind: input, shape index: {}]
  %s5 = inlined_call_operand.hbm [shape: bf16[128,128], index: 5, kind: input, shape index: {}]
  %s6 = inlined_call_operand.vmem [shape: f32[1,128], index: 6, kind: input, shape index: {}]
  %s7 = inlined_call_operand.hbm [shape: bf16[128,128], index: 7, kind: input, shape index: {}]
  %s8 = inlined_call_operand.vmem [shape: f32[1,128], index: 8, kind: input, shape index: {}]
  %s9 = inlined_call_operand.hbm [shape: f32[256,128], index: 9, kind: output, shape index: {}]
  %s10 = sld [smem:[#allocation0]]
  $region93: #{tpu_custom_call.1} parent=0
    _
  %s12 = ssub.s32 1, %s10
  %s13 = scalar_select 0, %s12, %s10
  $region1: #{tpu_custom_call.1} parent=0
    #allocation2 [shape = 'u8[131072]{0}', space=vmem, size = 0x20000, scoped, tag = 'input window, operand 0']
    #allocation3 [shape = 's32[2]{0}', space=sflag, size = 0x8, scoped, tag = 'scoped memory for tpu_custom_call.1']
    #allocation4 [shape = 's32[2]{0}', space=sflag, size = 0x8, scoped, tag = 'scoped memory for tpu_custom_call.1']
    #allocation5 [shape = 'u8[65536]{0}', space=vmem, size = 0x10000, scoped, tag = 'input window, operand 1']
    #allocation6 [shape = 's32[2]{0}', space=sflag, size = 0x8, scoped, tag = 'scoped memory for tpu_custom_call.1']
    #allocation7 [shape = 'u8[32768]{0}', space=vmem, size = 0x8000, scoped, tag = 'input window, operand 2, single buffered']
    #allocation8 [shape = 'u8[32768]{0}', space=vmem, size = 0x8000, scoped, tag = 'input window, operand 3, single buffered']
    #allocation9 [shape = 's32[1]{0}', space=sflag, size = 0x4, scoped, tag = 'scoped memory for tpu_custom_call.1']
    #allocation10 [shape = 'u8[32768]{0}', space=vmem, size = 0x8000, scoped, tag = 'input window, operand 5, single buffered']
    #allocation11 [shape = 'u8[32768]{0}', space=vmem, size = 0x8000, scoped, tag = 'input window, operand 7, single buffered']
    #allocation12 [shape = 's32[1]{0}', space=sflag, size = 0x4, scoped, tag = 'scoped memory for tpu_custom_call.1']
    #allocation13 [shape = 'u8[131072]{0}', space=vmem, size = 0x20000, scoped, tag = 'output window, operand 0']
    %14 = vsyncpa [#allocation3], 0
    %s15 = scalar_lea.sflag [#allocation3], 1
    %16 = vsyncpa %s15, 0
    %17 = vsyncpa [#allocation6], 0
    %s18 = scalar_lea.sflag [#allocation6], 1
    %19 = vsyncpa %s18, 0
    %20 = vsyncpa [#allocation9], 0
    %21 = vsyncpa [#allocation12], 0
    %22 = vsyncpa [#allocation4], 0
    %s23 = scalar_lea.sflag [#allocation4], 1
    %24 = vsyncpa %s23, 0
    loop: start=0, step=1, limit=4
    $region2: #{tpu_custom_call.1} parent=1 // loop_pre_header
      _
    $region3: #{tpu_custom_call.1} parent=1 // loop_header
      %s26 = sphi 0, %s30
      %p27 = scmp.ge.s32.totalorder %s26, 4
      %s36 = sphi 0, %s38
      %s39 = sphi 0, %s36
      %s40 = sphi 0, %s39
      %s56 = sphi 0, %s40
      %s62 = sphi 0, %s64
      %s65 = sphi 0, %s62
      %s66 = sphi 0, %s65
      %s82 = sphi 0, %s66
      %s86 = sphi 0, %s86
      %s88 = sphi 0, %s86
      %s89 = sphi 0, %s88
      %s103 = sphi 0, %s89
      %s107 = sphi 0, %s107
      %s109 = sphi 0, %s107
      %s110 = sphi 0, %s109
      %s124 = sphi 0, %s110
      %s128 = sphi 0, %s128
      %s130 = sphi 0, %s128
      %s131 = sphi 0, %s130
      %s145 = sphi 0, %s131
      %s149 = sphi 0, %s149
      %s151 = sphi 0, %s149
      %s152 = sphi 0, %s151
      %s166 = sphi 0, %s152
      %s170 = sphi 0, %s170
      %s172 = sphi 0, %s170
      %s173 = sphi 0, %s172
      %s187 = sphi 0, %s173
      %s191 = sphi 0, %s191
      %s193 = sphi 0, %s191
      %s194 = sphi 0, %s193
      %s208 = sphi 0, %s194
      %s212 = sphi 0, %s212
      %s214 = sphi 0, %s212
      %s215 = sphi 0, %s214
      %s229 = sphi 0, %s215
      %s235 = sphi 0, %s237
      %s238 = sphi 0, %s235
      %s239 = sphi 0, %s238
      %s255 = sphi 0, %s239
    $region4: #{tpu_custom_call.1} parent=1 // loop_header_branch
      %29 = sbr.rel (%p27) target = $region8
    $region5: #{tpu_custom_call.1} parent=1 // loop_body
      %s31 = ssub.s32 %s26, 1
      %s32 = ssub.s32 %s26, 2
      %s33 = sadd.s32 %s26, 1
      %s34 = ssub.s32 %s26, %s33
      %p35 = scmp.eq.s32.totalorder %s34, 0
      %s37 = sadd.s32 %s36, 1
      %s38 = scalar_select %p35, %s36, %s37
      %p41 = pneg %p35
      %p42 = scmp.eq.s32.totalorder %s26, 1
      %p43 = por %p41, %p42
      %p44 = scmp.ne.s32.totalorder %s36, %s39
      %p45 = scmp.eq.s32.totalorder %s26, 0
      %p46 = por %p44, %p45
      %p47 = scmp.ne.s32.totalorder %s36, %s39
      %p48 = scmp.eq.s32.totalorder %s31, 1
      %p49 = por %p47, %p48
      %p50 = scmp.ne.s32.totalorder %s39, %s40
      %p51 = scmp.eq.s32.totalorder %s31, 0
      %p52 = por %p50, %p51
      %p53 = scmp.ne.s32.totalorder %s39, %s40
      %p54 = scmp.eq.s32.totalorder %s32, 1
      %p55 = por %p53, %p54
      %p57 = scmp.ne.s32.totalorder %s40, %s56
      %p58 = scmp.eq.s32.totalorder %s32, 0
      %p59 = por %p57, %p58
      %s60 = ssub.s32 %s26, %s33
      %p61 = scmp.eq.s32.totalorder %s60, 0
      %s63 = sadd.s32 %s62, 1
      %s64 = scalar_select %p61, %s62, %s63
      %p67 = pneg %p61
      %p68 = scmp.eq.s32.totalorder %s26, 1
      %p69 = por %p67, %p68
      %p70 = scmp.ne.s32.totalorder %s62, %s65
      %p71 = scmp.eq.s32.totalorder %s26, 0
      %p72 = por %p70, %p71
      %p73 = scmp.ne.s32.totalorder %s62, %s65
      %p74 = scmp.eq.s32.totalorder %s31, 1
      %p75 = por %p73, %p74
      %p76 = scmp.ne.s32.totalorder %s65, %s66
      %p77 = scmp.eq.s32.totalorder %s31, 0
      %p78 = por %p76, %p77
      %p79 = scmp.ne.s32.totalorder %s65, %s66
      %p80 = scmp.eq.s32.totalorder %s32, 1
      %p81 = por %p79, %p80
      %p83 = scmp.ne.s32.totalorder %s66, %s82
      %p84 = scmp.eq.s32.totalorder %s32, 0
      %p85 = por %p83, %p84
      %s87 = sadd.s32 %s86, 1
      %p90 = scmp.eq.s32.totalorder %s26, 1
      %p91 = scmp.ne.s32.totalorder %s86, %s88
      %p92 = scmp.eq.s32.totalorder %s26, 0
      %p93 = por %p91, %p92
      %p94 = scmp.ne.s32.totalorder %s86, %s88
      %p95 = scmp.eq.s32.totalorder %s31, 1
      %p96 = por %p94, %p95
      %p97 = scmp.ne.s32.totalorder %s88, %s89
      %p98 = scmp.eq.s32.totalorder %s31, 0
      %p99 = por %p97, %p98
      %p100 = scmp.ne.s32.totalorder %s88, %s89
      %p101 = scmp.eq.s32.totalorder %s32, 1
      %p102 = por %p100, %p101
      %p104 = scmp.ne.s32.totalorder %s89, %s103
      %p105 = scmp.eq.s32.totalorder %s32, 0
      %p106 = por %p104, %p105
      %s108 = sadd.s32 %s107, 1
      %p111 = scmp.eq.s32.totalorder %s26, 1
      %p112 = scmp.ne.s32.totalorder %s107, %s109
      %p113 = scmp.eq.s32.totalorder %s26, 0
      %p114 = por %p112, %p113
      %p115 = scmp.ne.s32.totalorder %s107, %s109
      %p116 = scmp.eq.s32.totalorder %s31, 1
      %p117 = por %p115, %p116
      %p118 = scmp.ne.s32.totalorder %s109, %s110
      %p119 = scmp.eq.s32.totalorder %s31, 0
      %p120 = por %p118, %p119
      %p121 = scmp.ne.s32.totalorder %s109, %s110
      %p122 = scmp.eq.s32.totalorder %s32, 1
      %p123 = por %p121, %p122
      %p125 = scmp.ne.s32.totalorder %s110, %s124
      %p126 = scmp.eq.s32.totalorder %s32, 0
      %p127 = por %p125, %p126
      %s129 = sadd.s32 %s128, 1
      %p132 = scmp.eq.s32.totalorder %s26, 1
      %p133 = scmp.ne.s32.totalorder %s128, %s130
      %p134 = scmp.eq.s32.totalorder %s26, 0
      %p135 = por %p133, %p134
      %p136 = scmp.ne.s32.totalorder %s128, %s130
      %p137 = scmp.eq.s32.totalorder %s31, 1
      %p138 = por %p136, %p137
      %p139 = scmp.ne.s32.totalorder %s130, %s131
      %p140 = scmp.eq.s32.totalorder %s31, 0
      %p141 = por %p139, %p140
      %p142 = scmp.ne.s32.totalorder %s130, %s131
      %p143 = scmp.eq.s32.totalorder %s32, 1
      %p144 = por %p142, %p143
      %p146 = scmp.ne.s32.totalorder %s131, %s145
      %p147 = scmp.eq.s32.totalorder %s32, 0
      %p148 = por %p146, %p147
      %s150 = sadd.s32 %s149, 1
      %p153 = scmp.eq.s32.totalorder %s26, 1
      %p154 = scmp.ne.s32.totalorder %s149, %s151
      %p155 = scmp.eq.s32.totalorder %s26, 0
      %p156 = por %p154, %p155
      %p157 = scmp.ne.s32.totalorder %s149, %s151
      %p158 = scmp.eq.s32.totalorder %s31, 1
      %p159 = por %p157, %p158
      %p160 = scmp.ne.s32.totalorder %s151, %s152
      %p161 = scmp.eq.s32.totalorder %s31, 0
      %p162 = por %p160, %p161
      %p163 = scmp.ne.s32.totalorder %s151, %s152
      %p164 = scmp.eq.s32.totalorder %s32, 1
      %p165 = por %p163, %p164
      %p167 = scmp.ne.s32.totalorder %s152, %s166
      %p168 = scmp.eq.s32.totalorder %s32, 0
      %p169 = por %p167, %p168
      %s171 = sadd.s32 %s170, 1
      %p174 = scmp.eq.s32.totalorder %s26, 1
      %p175 = scmp.ne.s32.totalorder %s170, %s172
      %p176 = scmp.eq.s32.totalorder %s26, 0
      %p177 = por %p175, %p176
      %p178 = scmp.ne.s32.totalorder %s170, %s172
      %p179 = scmp.eq.s32.totalorder %s31, 1
      %p180 = por %p178, %p179
      %p181 = scmp.ne.s32.totalorder %s172, %s173
      %p182 = scmp.eq.s32.totalorder %s31, 0
      %p183 = por %p181, %p182
      %p184 = scmp.ne.s32.totalorder %s172, %s173
      %p185 = scmp.eq.s32.totalorder %s32, 1
      %p186 = por %p184, %p185
      %p188 = scmp.ne.s32.totalorder %s173, %s187
      %p189 = scmp.eq.s32.totalorder %s32, 0
      %p190 = por %p188, %p189
      %s192 = sadd.s32 %s191, 1
      %p195 = scmp.eq.s32.totalorder %s26, 1
      %p196 = scmp.ne.s32.totalorder %s191, %s193
      %p197 = scmp.eq.s32.totalorder %s26, 0
      %p198 = por %p196, %p197
      %p199 = scmp.ne.s32.totalorder %s191, %s193
      %p200 = scmp.eq.s32.totalorder %s31, 1
      %p201 = por %p199, %p200
      %p202 = scmp.ne.s32.totalorder %s193, %s194
      %p203 = scmp.eq.s32.totalorder %s31, 0
      %p204 = por %p202, %p203
      %p205 = scmp.ne.s32.totalorder %s193, %s194
      %p206 = scmp.eq.s32.totalorder %s32, 1
      %p207 = por %p205, %p206
      %p209 = scmp.ne.s32.totalorder %s194, %s208
      %p210 = scmp.eq.s32.totalorder %s32, 0
      %p211 = por %p209, %p210
      %s213 = sadd.s32 %s212, 1
      %p216 = scmp.eq.s32.totalorder %s26, 1
      %p217 = scmp.ne.s32.totalorder %s212, %s214
      %p218 = scmp.eq.s32.totalorder %s26, 0
      %p219 = por %p217, %p218
      %p220 = scmp.ne.s32.totalorder %s212, %s214
      %p221 = scmp.eq.s32.totalorder %s31, 1
      %p222 = por %p220, %p221
      %p223 = scmp.ne.s32.totalorder %s214, %s215
      %p224 = scmp.eq.s32.totalorder %s31, 0
      %p225 = por %p223, %p224
      %p226 = scmp.ne.s32.totalorder %s214, %s215
      %p227 = scmp.eq.s32.totalorder %s32, 1
      %p228 = por %p226, %p227
      %p230 = scmp.ne.s32.totalorder %s215, %s229
      %p231 = scmp.eq.s32.totalorder %s32, 0
      %p232 = por %p230, %p231
      %s233 = ssub.s32 %s26, %s33
      %p234 = scmp.eq.s32.totalorder %s233, 0
      %s236 = sadd.s32 %s235, 1
      %s237 = scalar_select %p234, %s235, %s236
      %p240 = pneg %p234
      %p241 = scmp.eq.s32.totalorder %s26, 1
      %p242 = por %p240, %p241
      %p243 = scmp.ne.s32.totalorder %s235, %s238
      %p244 = scmp.eq.s32.totalorder %s26, 0
      %p245 = por %p243, %p244
      %p246 = scmp.ne.s32.totalorder %s235, %s238
      %p247 = scmp.eq.s32.totalorder %s31, 1
      %p248 = por %p246, %p247
      %p249 = scmp.ne.s32.totalorder %s238, %s239
      %p250 = scmp.eq.s32.totalorder %s31, 0
      %p251 = por %p249, %p250
      %p252 = scmp.ne.s32.totalorder %s238, %s239
      %p253 = scmp.eq.s32.totalorder %s32, 1
      %p254 = por %p252, %p253
      %p256 = scmp.ne.s32.totalorder %s239, %s255
      %p257 = scmp.eq.s32.totalorder %s32, 0
      %p258 = por %p256, %p257
      %p259 = scmp.le.s32.totalorder 1, %s26
      %p260 = scmp.lt.s32.totalorder %s26, 3
      %p261 = pnand %p259, %p260
      %p262 = pneg %p261
      // Predicated region
      $region9: #{tpu_custom_call.1} parent=5 // pred_check
        _
      $region10: #{tpu_custom_call.1} parent=5 // pred_check_branch
        %264 = sbr.rel (%p261) target = $region12
      $region11: #{tpu_custom_call.1} parent=5 // pred_region
        %s265 = ssub.s32 %s26, 1
        // Predicated region
        $region13: #{tpu_custom_call.1} parent=11 // pred_check
          %p266 = pneg %p99
        $region14: #{tpu_custom_call.1} parent=11 // pred_check_branch
          %268 = sbr.rel (%p266) target = $region16
        $region15: #{tpu_custom_call.1} parent=11 // pred_region
          %s270 = ssub.s32 1024, 1024
          %271 = vsyncadd [#allocation6], %s270
          %s272 = sshll.u32 [#allocation7], 4
          %s273 = int_to_ptr.vmem [resolvable:$true] %s272
          %278 = dma.hbm_to_vmem [thread:$0]  %s2, 1024, %s273, [#allocation6], 64, 64, 4
        $region16: #{tpu_custom_call.1} parent=11 // pred_fallthru
          _
        // Predicated region
        $region17: #{tpu_custom_call.1} parent=11 // pred_check
          %p279 = pneg %p120
        $region18: #{tpu_custom_call.1} parent=11 // pred_check_branch
          %281 = sbr.rel (%p279) target = $region20
        $region19: #{tpu_custom_call.1} parent=11 // pred_region
          %s283 = ssub.s32 1024, 1024
          %284 = vsyncadd [#allocation9], %s283
          %s285 = sshll.u32 [#allocation8], 4
          %s286 = int_to_ptr.vmem [resolvable:$true] %s285
          %291 = dma.hbm_to_vmem [thread:$0]  %s3, 1024, %s286, [#allocation9], 64, 64, 4
        $region20: #{tpu_custom_call.1} parent=11 // pred_fallthru
          _
        // Predicated region
        $region21: #{tpu_custom_call.1} parent=11 // pred_check
          %p292 = pneg %p141
        $region22: #{tpu_custom_call.1} parent=11 // pred_check_branch
          %294 = sbr.rel (%p292) target = $region24
        $region23: #{tpu_custom_call.1} parent=11 // pred_region
          _
        $region24: #{tpu_custom_call.1} parent=11 // pred_fallthru
          _
        // Predicated region
        $region25: #{tpu_custom_call.1} parent=11 // pred_check
          %p295 = pneg %p162
        $region26: #{tpu_custom_call.1} parent=11 // pred_check_branch
          %297 = sbr.rel (%p295) target = $region28
        $region27: #{tpu_custom_call.1} parent=11 // pred_region
          %s299 = ssub.s32 1024, 1024
          %300 = vsyncadd [#allocation9], %s299
          %s301 = sshll.u32 [#allocation10], 4
          %s302 = int_to_ptr.vmem [resolvable:$true] %s301
          %307 = dma.hbm_to_vmem [thread:$0]  %s5, 1024, %s302, [#allocation9], 64, 64, 4
        $region28: #{tpu_custom_call.1} parent=11 // pred_fallthru
          _
        // Predicated region
        $region29: #{tpu_custom_call.1} parent=11 // pred_check
          %p308 = pneg %p183
        $region30: #{tpu_custom_call.1} parent=11 // pred_check_branch
          %310 = sbr.rel (%p308) target = $region32
        $region31: #{tpu_custom_call.1} parent=11 // pred_region
          _
        $region32: #{tpu_custom_call.1} parent=11 // pred_fallthru
          _
        // Predicated region
        $region33: #{tpu_custom_call.1} parent=11 // pred_check
          %p311 = pneg %p204
        $region34: #{tpu_custom_call.1} parent=11 // pred_check_branch
          %313 = sbr.rel (%p311) target = $region36
        $region35: #{tpu_custom_call.1} parent=11 // pred_region
          %s315 = ssub.s32 1024, 1024
          %316 = vsyncadd [#allocation12], %s315
          %s317 = sshll.u32 [#allocation11], 4
          %s318 = int_to_ptr.vmem [resolvable:$true] %s317
          %323 = dma.hbm_to_vmem [thread:$0]  %s7, 1024, %s318, [#allocation12], 64, 64, 4
        $region36: #{tpu_custom_call.1} parent=11 // pred_fallthru
          _
        // Predicated region
        $region37: #{tpu_custom_call.1} parent=11 // pred_check
          %p324 = pneg %p225
        $region38: #{tpu_custom_call.1} parent=11 // pred_check_branch
          %326 = sbr.rel (%p324) target = $region40
        $region39: #{tpu_custom_call.1} parent=11 // pred_region
          _
        $region40: #{tpu_custom_call.1} parent=11 // pred_fallthru
          _
      $region12: #{tpu_custom_call.1} parent=5 // pred_fallthru
        _
      %p327 = scmp.lt.s32.totalorder %s26, 2
      // Predicated region
      $region41: #{tpu_custom_call.1} parent=5 // pred_check
        %p328 = pneg %p327
      $region42: #{tpu_custom_call.1} parent=5 // pred_check_branch
        %330 = sbr.rel (%p328) target = $region44
      $region43: #{tpu_custom_call.1} parent=5 // pred_region
        // Predicated region
        $region45: #{tpu_custom_call.1} parent=43 // pred_check
          %p331 = pneg %p46
        $region46: #{tpu_custom_call.1} parent=43 // pred_check_branch
          %333 = sbr.rel (%p331) target = $region48
        $region47: #{tpu_custom_call.1} parent=43 // pred_region
          %s334 = sand.u32 %s36, 1
          %s335 = scalar_lea.sflag [#allocation3], %s334
          %s336 = sand.u32 %s36, 1
          %s337 = smul.addr %s336, 128
          %s338 = scalar_lea.vmem [#allocation2], %s337
          %s339 = smul.u32 16, %s26
          %s341 = ssub.s32 2048, 2048
          %342 = vsyncadd %s335, %s341
          %s343 = smul.addr %s339, 128
          %s344 = scalar_lea.hbm %s0, %s343
          %s345 = sshll.u32 %s338, 4
          %s346 = int_to_ptr.vmem [resolvable:$true] %s345
          %351 = dma.hbm_to_vmem [thread:$0]  %s344, 2048, %s346, %s335, 128, 128, 8
        $region48: #{tpu_custom_call.1} parent=43 // pred_fallthru
          _
        // Predicated region
        $region49: #{tpu_custom_call.1} parent=43 // pred_check
          %p352 = pneg %p72
        $region50: #{tpu_custom_call.1} parent=43 // pred_check_branch
          %354 = sbr.rel (%p352) target = $region52
        $region51: #{tpu_custom_call.1} parent=43 // pred_region
          %s355 = sand.u32 %s26, 1
          %s356 = scalar_lea.sflag [#allocation6], %s355
          %s357 = sand.u32 %s62, 1
          %s358 = smul.addr %s357, 64
          %s359 = scalar_lea.vmem [#allocation5], %s358
          %s360 = smul.u32 16, %s26
          %s362 = ssub.s32 1024, 1024
          %363 = vsyncadd %s356, %s362
          %s364 = smul.addr %s360, 64
          %s365 = scalar_lea.hbm %s1, %s364
          %s366 = sshll.u32 %s359, 4
          %s367 = int_to_ptr.vmem [resolvable:$true] %s366
          %372 = dma.hbm_to_vmem [thread:$0]  %s365, 1024, %s367, %s356, 64, 64, 4
        $region52: #{tpu_custom_call.1} parent=43 // pred_fallthru
          _
      $region44: #{tpu_custom_call.1} parent=5 // pred_fallthru
        _
      %p373 = scmp.le.s32.totalorder 1, %s26
      %p374 = scmp.lt.s32.totalorder %s26, 3
      %p375 = pnand %p373, %p374
      %p376 = pneg %p375
      // Predicated region
      $region53: #{tpu_custom_call.1} parent=5 // pred_check
        _
      $region54: #{tpu_custom_call.1} parent=5 // pred_check_branch
        %378 = sbr.rel (%p375) target = $region56
      $region55: #{tpu_custom_call.1} parent=5 // pred_region
        %s379 = ssub.s32 %s26, 1
        %s380 = sand.u32 %s39, 1
        %s381 = scalar_lea.sflag [#allocation3], %s380
        %s382 = sand.u32 %s39, 1
        %s383 = smul.addr %s382, 128
        %s384 = scalar_lea.vmem [#allocation2], %s383
        // Predicated region
        $region57: #{tpu_custom_call.1} parent=55 // pred_check
          %p385 = pneg %p52
        $region58: #{tpu_custom_call.1} parent=55 // pred_check_branch
          %387 = sbr.rel (%p385) target = $region60
        $region59: #{tpu_custom_call.1} parent=55 // pred_region
          %388 = dma.done %s381, 2048
        $region60: #{tpu_custom_call.1} parent=55 // pred_fallthru
          _
        %s389 = sand.u32 %s31, 1
        %s390 = scalar_lea.sflag [#allocation6], %s389
        %s391 = sand.u32 %s65, 1
        %s392 = smul.addr %s391, 64
        %s393 = scalar_lea.vmem [#allocation5], %s392
        // Predicated region
        $region61: #{tpu_custom_call.1} parent=55 // pred_check
          %p394 = pneg %p78
        $region62: #{tpu_custom_call.1} parent=55 // pred_check_branch
          %396 = sbr.rel (%p394) target = $region64
        $region63: #{tpu_custom_call.1} parent=55 // pred_region
          %397 = dma.done %s390, 1024
        $region64: #{tpu_custom_call.1} parent=55 // pred_fallthru
          _
        // Predicated region
        $region65: #{tpu_custom_call.1} parent=55 // pred_check
          %p398 = pneg %p99
        $region66: #{tpu_custom_call.1} parent=55 // pred_check_branch
          %400 = sbr.rel (%p398) target = $region68
        $region67: #{tpu_custom_call.1} parent=55 // pred_region
          %401 = dma.done [#allocation6], 1024
        $region68: #{tpu_custom_call.1} parent=55 // pred_fallthru
          _
        // Predicated region
        $region69: #{tpu_custom_call.1} parent=55 // pred_check
          %p402 = pneg %p120
        $region70: #{tpu_custom_call.1} parent=55 // pred_check_branch
          %404 = sbr.rel (%p402) target = $region72
        $region71: #{tpu_custom_call.1} parent=55 // pred_region
          %405 = dma.done [#allocation9], 1024
        $region72: #{tpu_custom_call.1} parent=55 // pred_fallthru
          _
        // Predicated region
        $region73: #{tpu_custom_call.1} parent=55 // pred_check
          %p406 = pneg %p162
        $region74: #{tpu_custom_call.1} parent=55 // pred_check_branch
          %408 = sbr.rel (%p406) target = $region76
        $region75: #{tpu_custom_call.1} parent=55 // pred_region
          %409 = dma.done [#allocation9], 1024
        $region76: #{tpu_custom_call.1} parent=55 // pred_fallthru
          _
        // Predicated region
        $region77: #{tpu_custom_call.1} parent=55 // pred_check
          %p410 = pneg %p204
        $region78: #{tpu_custom_call.1} parent=55 // pred_check_branch
          %412 = sbr.rel (%p410) target = $region80
        $region79: #{tpu_custom_call.1} parent=55 // pred_region
          %413 = dma.done [#allocation12], 1024
        $region80: #{tpu_custom_call.1} parent=55 // pred_fallthru
          _
        %s414 = sand.u32 %s39, 1
        %s415 = scalar_lea.sflag [#allocation3], %s414
        %s416 = sand.u32 %s39, 1
        %s417 = smul.addr %s416, 128
        %s418 = scalar_lea.vmem [#allocation2], %s417
        %p419 = pneg %p52
        %p420 = pneg %p49
        %s421 = sand.u32 %s31, 1
        %s422 = scalar_lea.sflag [#allocation6], %s421
        %s423 = sand.u32 %s65, 1
        %s424 = smul.addr %s423, 64
        %s425 = scalar_lea.vmem [#allocation5], %s424
        %p426 = pneg %p78
        %p427 = pneg %p75
        %p428 = pneg %p99
        %p429 = pneg %p96
        %p430 = pneg %p120
        %p431 = pneg %p117
        %p432 = pneg %p141
        %p433 = pneg %p138
        %p434 = pneg %p162
        %p435 = pneg %p159
        %p436 = pneg %p183
        %p437 = pneg %p180
        %p438 = pneg %p204
        %p439 = pneg %p201
        %p440 = pneg %p225
        %p441 = pneg %p222
        %p442 = pneg %p251
        %p443 = pneg %p248
        %s444 = sand.u32 %s238, 1
        %s445 = scalar_lea.sflag [#allocation4], %s444
        %s446 = sand.u32 %s238, 1
        %s447 = smul.addr %s446, 128
        %s448 = scalar_lea.vmem [#allocation13], %s447
        %s449 = smul.u32 16, %s31
        %s450 = smul.u32 16, %s31
        %s451 = smul.u32 16, %s31
        %v453 = vld [vmem:[%s384] sm:$0xff]
        %v454 = vld [vmem:[%s384 + $0x8] sm:$0xff]
        %v455 = vld [vmem:[%s384 + $0x10] sm:$0xff]
        %v456 = vld [vmem:[%s384 + $0x18] sm:$0xff]
        %v457 = vld [vmem:[%s384 + $0x20] sm:$0xff]
        %v458 = vld [vmem:[%s384 + $0x28] sm:$0xff]
        %v459 = vld [vmem:[%s384 + $0x30] sm:$0xff]
        %v460 = vld [vmem:[%s384 + $0x38] sm:$0xff]
        %v461 = vld [vmem:[%s384 + $0x40] sm:$0xff]
        %v462 = vld [vmem:[%s384 + $0x48] sm:$0xff]
        %v463 = vld [vmem:[%s384 + $0x50] sm:$0xff]
        %v464 = vld [vmem:[%s384 + $0x58] sm:$0xff]
        %v465 = vld [vmem:[%s384 + $0x60] sm:$0xff]
        %v466 = vld [vmem:[%s384 + $0x68] sm:$0xff]
        %v467 = vld [vmem:[%s384 + $0x70] sm:$0xff]
        %v468 = vld [vmem:[%s384 + $0x78] sm:$0xff]
        %v469 = vpack.c.bf16 %v454, %v453
        %v470 = vpack.c.bf16 %v456, %v455
        %v471 = vpack.c.bf16 %v458, %v457
        %v472 = vpack.c.bf16 %v460, %v459
        %v473 = vpack.c.bf16 %v462, %v461
        %v474 = vpack.c.bf16 %v464, %v463
        %v475 = vpack.c.bf16 %v466, %v465
        %v476 = vpack.c.bf16 %v468, %v467
        %v477 = vld [vmem:[%s393] sm:$0xf]
        %v478 = vld [vmem:[%s393 + $0x4] sm:$0xf]
        %v479 = vld [vmem:[%s393 + $0x8] sm:$0xf]
        %v480 = vld [vmem:[%s393 + $0xc] sm:$0xf]
        %v481 = vld [vmem:[%s393 + $0x10] sm:$0xf]
        %v482 = vld [vmem:[%s393 + $0x14] sm:$0xf]
        %v483 = vld [vmem:[%s393 + $0x18] sm:$0xf]
        %v484 = vld [vmem:[%s393 + $0x1c] sm:$0xf]
        %v485 = vld [vmem:[%s393 + $0x20] sm:$0xf]
        %v486 = vld [vmem:[%s393 + $0x24] sm:$0xf]
        %v487 = vld [vmem:[%s393 + $0x28] sm:$0xf]
        %v488 = vld [vmem:[%s393 + $0x2c] sm:$0xf]
        %v489 = vld [vmem:[%s393 + $0x30] sm:$0xf]
        %v490 = vld [vmem:[%s393 + $0x34] sm:$0xf]
        %v491 = vld [vmem:[%s393 + $0x38] sm:$0xf]
        %v492 = vld [vmem:[%s393 + $0x3c] sm:$0xf]
        %v493 = vld [vmem:[#allocation7] sm:$0xf]
        %v494 = vld [vmem:[#allocation7 + $0x4] sm:$0xf]
        %v495 = vld [vmem:[#allocation7 + $0x8] sm:$0xf]
        %v496 = vld [vmem:[#allocation7 + $0xc] sm:$0xf]
        %v497 = vld [vmem:[#allocation7 + $0x10] sm:$0xf]
        %v498 = vld [vmem:[#allocation7 + $0x14] sm:$0xf]
        %v499 = vld [vmem:[#allocation7 + $0x18] sm:$0xf]
        %v500 = vld [vmem:[#allocation7 + $0x1c] sm:$0xf]
        %v501 = vld [vmem:[#allocation7 + $0x20] sm:$0xf]
        %v502 = vld [vmem:[#allocation7 + $0x24] sm:$0xf]
        %v503 = vld [vmem:[#allocation7 + $0x28] sm:$0xf]
        %v504 = vld [vmem:[#allocation7 + $0x2c] sm:$0xf]
        %v505 = vld [vmem:[#allocation7 + $0x30] sm:$0xf]
        %v506 = vld [vmem:[#allocation7 + $0x34] sm:$0xf]
        %v507 = vld [vmem:[#allocation7 + $0x38] sm:$0xf]
        %v508 = vld [vmem:[#allocation7 + $0x3c] sm:$0xf]
        %v509 = vld [vmem:[#allocation8] sm:$0xf]
        %v510 = vld [vmem:[#allocation8 + $0x4] sm:$0xf]
        %v511 = vld [vmem:[#allocation8 + $0x8] sm:$0xf]
        %v512 = vld [vmem:[#allocation8 + $0xc] sm:$0xf]
        %v513 = vld [vmem:[#allocation8 + $0x10] sm:$0xf]
        %v514 = vld [vmem:[#allocation8 + $0x14] sm:$0xf]
        %v515 = vld [vmem:[#allocation8 + $0x18] sm:$0xf]
        %v516 = vld [vmem:[#allocation8 + $0x1c] sm:$0xf]
        %v517 = vld [vmem:[#allocation8 + $0x20] sm:$0xf]
        %v518 = vld [vmem:[#allocation8 + $0x24] sm:$0xf]
        %v519 = vld [vmem:[#allocation8 + $0x28] sm:$0xf]
        %v520 = vld [vmem:[#allocation8 + $0x2c] sm:$0xf]
        %v521 = vld [vmem:[#allocation8 + $0x30] sm:$0xf]
        %v522 = vld [vmem:[#allocation8 + $0x34] sm:$0xf]
        %v523 = vld [vmem:[#allocation8 + $0x38] sm:$0xf]
        %v524 = vld [vmem:[#allocation8 + $0x3c] sm:$0xf]
        %v541 = vunpack.c.l.b16 %v477
        %v542 = vunpack.c.l.b16 %v478
        %v543 = vunpack.c.l.b16 %v479
        %v544 = vunpack.c.l.b16 %v480
        %v545 = vunpack.c.l.b16 %v481
        %v546 = vunpack.c.l.b16 %v482
        %v547 = vunpack.c.l.b16 %v483
        %v548 = vunpack.c.l.b16 %v484
        %v549 = vunpack.c.l.b16 %v485
        %v550 = vunpack.c.l.b16 %v486
        %v551 = vunpack.c.l.b16 %v487
        %v552 = vunpack.c.l.b16 %v488
        %v553 = vunpack.c.l.b16 %v489
        %v554 = vunpack.c.l.b16 %v490
        %v555 = vunpack.c.l.b16 %v491
        %v556 = vunpack.c.l.b16 %v492
        %v557 = vpack.c.b16 %v542, %v541
        %v558 = vpack.c.b16 %v544, %v543
        %v559 = vpack.c.b16 %v546, %v545
        %v560 = vpack.c.b16 %v548, %v547
        %v561 = vpack.c.b16 %v550, %v549
        %v562 = vpack.c.b16 %v552, %v551
        %v563 = vpack.c.b16 %v554, %v553
        %v564 = vpack.c.b16 %v556, %v555
        %v589 = vunpack.c.l.b16 %v509
        %v590 = vunpack.c.l.b16 %v510
        %v591 = vunpack.c.l.b16 %v511
        %v592 = vunpack.c.l.b16 %v512
        %v593 = vunpack.c.l.b16 %v513
        %v594 = vunpack.c.l.b16 %v514
        %v595 = vunpack.c.l.b16 %v515
        %v596 = vunpack.c.l.b16 %v516
        %v597 = vunpack.c.l.b16 %v517
        %v598 = vunpack.c.l.b16 %v518
        %v599 = vunpack.c.l.b16 %v519
        %v600 = vunpack.c.l.b16 %v520
        %v601 = vunpack.c.l.b16 %v521
        %v602 = vunpack.c.l.b16 %v522
        %v603 = vunpack.c.l.b16 %v523
        %v604 = vunpack.c.l.b16 %v524
        %v605 = vpack.c.b16 %v590, %v589
        %v606 = vpack.c.b16 %v592, %v591
        %v607 = vpack.c.b16 %v594, %v593
        %v608 = vpack.c.b16 %v596, %v595
        %v609 = vpack.c.b16 %v598, %v597
        %v610 = vpack.c.b16 %v600, %v599
        %v611 = vpack.c.b16 %v602, %v601
        %v612 = vpack.c.b16 %v604, %v603
        %621 = vmatprep.subr.bf16.mxu0 0
        %622 = vmatpush1.bf16.msra.mxu0 %v605
        %623 = vmatprep.subr.bf16.mxu0 0
        %624 = vmatpush1.bf16.msra.mxu0 %v606
        %625 = vmatprep.subr.bf16.mxu0 0
        %626 = vmatpush1.bf16.msra.mxu0 %v607
        %627 = vmatprep.subr.bf16.mxu0 0
        %628 = vmatpush1.bf16.msra.mxu0 %v608
        %629 = vmatprep.subr.bf16.mxu0 0
        %630 = vmatpush1.bf16.msra.mxu0 %v609
        %631 = vmatprep.subr.bf16.mxu0 0
        %632 = vmatpush1.bf16.msra.mxu0 %v610
        %633 = vmatprep.subr.bf16.mxu0 0
        %634 = vmatpush1.bf16.msra.mxu0 %v611
        %635 = vmatprep.subr.bf16.mxu0 0
        %636 = vmatpush1.bf16.msra.mxu0 %v612
        %637 = vmatprep.subr.bf16.mxu0 0
        %638 = vmatpush1.bf16.msra.mxu0 0
        %639 = vmatprep.subr.bf16.mxu0 0
        %640 = vmatpush1.bf16.msra.mxu0 0
        %641 = vmatprep.subr.bf16.mxu0 0
        %642 = vmatpush1.bf16.msra.mxu0 0
        %643 = vmatprep.subr.bf16.mxu0 0
        %644 = vmatpush1.bf16.msra.mxu0 0
        %645 = vmatprep.subr.bf16.mxu0 0
        %646 = vmatpush1.bf16.msra.mxu0 0
        %647 = vmatprep.subr.bf16.mxu0 0
        %648 = vmatpush1.bf16.msra.mxu0 0
        %649 = vmatprep.subr.bf16.mxu0 0
        %650 = vmatpush1.bf16.msra.mxu0 0
        %651 = vmatprep.subr.bf16.mxu0 0
        %652 = vmatpush1.bf16.msra.mxu0 0
        %653 = vmatprep.mubr.bf16.mxu0 0
        %654 = vmatmul.mubr.bf16.gmra.mrb[0].mxu0 %v557
        %v655 = vpop.f32.mrb[0].mxu0
        %v656 = vadd.f32 0.0, %v655
        %v657 = vpop.f32.mrb[0].mxu0
        %v658 = vpop.f32.mrb[0].mxu0
        %v659 = vadd.f32 0.0, %v658
        %v660 = vpop.f32.mrb[0].mxu0
        %661 = vmatprep.mubr.bf16.mxu0 0
        %662 = vmatmul.mubr.bf16.gmra.mrb[0].mxu0 %v558
        %v663 = vpop.f32.mrb[0].mxu0
        %v664 = vadd.f32 0.0, %v663
        %v665 = vpop.f32.mrb[0].mxu0
        %v666 = vpop.f32.mrb[0].mxu0
        %v667 = vadd.f32 0.0, %v666
        %v668 = vpop.f32.mrb[0].mxu0
        %669 = vmatprep.mubr.bf16.mxu0 0
        %670 = vmatmul.mubr.bf16.gmra.mrb[0].mxu0 %v559
        %v671 = vpop.f32.mrb[0].mxu0
        %v672 = vadd.f32 0.0, %v671
        %v673 = vpop.f32.mrb[0].mxu0
        %v674 = vpop.f32.mrb[0].mxu0
        %v675 = vadd.f32 0.0, %v674
        %v676 = vpop.f32.mrb[0].mxu0
        %677 = vmatprep.mubr.bf16.mxu0 0
        %678 = vmatmul.mubr.bf16.gmra.mrb[0].mxu0 %v560
        %v679 = vpop.f32.mrb[0].mxu0
        %v680 = vadd.f32 0.0, %v679
        %v681 = vpop.f32.mrb[0].mxu0
        %v682 = vpop.f32.mrb[0].mxu0
        %v683 = vadd.f32 0.0, %v682
        %v684 = vpop.f32.mrb[0].mxu0
        %685 = vmatprep.mubr.bf16.mxu0 0
        %686 = vmatmul.mubr.bf16.gmra.mrb[0].mxu0 %v561
        %v687 = vpop.f32.mrb[0].mxu0
        %v688 = vadd.f32 0.0, %v687
        %v689 = vpop.f32.mrb[0].mxu0
        %v690 = vpop.f32.mrb[0].mxu0
        %v691 = vadd.f32 0.0, %v690
        %v692 = vpop.f32.mrb[0].mxu0
        %693 = vmatprep.mubr.bf16.mxu0 0
        %694 = vmatmul.mubr.bf16.gmra.mrb[0].mxu0 %v562
        %v695 = vpop.f32.mrb[0].mxu0
        %v696 = vadd.f32 0.0, %v695
        %v697 = vpop.f32.mrb[0].mxu0
        %v698 = vpop.f32.mrb[0].mxu0
        %v699 = vadd.f32 0.0, %v698
        %v700 = vpop.f32.mrb[0].mxu0
        %701 = vmatprep.mubr.bf16.mxu0 0
        %702 = vmatmul.mubr.bf16.gmra.mrb[0].mxu0 %v563
        %v703 = vpop.f32.mrb[0].mxu0
        %v704 = vadd.f32 0.0, %v703
        %v705 = vpop.f32.mrb[0].mxu0
        %v706 = vpop.f32.mrb[0].mxu0
        %v707 = vadd.f32 0.0, %v706
        %v708 = vpop.f32.mrb[0].mxu0
        %709 = vmatprep.mubr.bf16.mxu0 0
        %710 = vmatmul.mubr.bf16.gmra.mrb[0].mxu0 %v564
        %v711 = vpop.f32.mrb[0].mxu0
        %v712 = vadd.f32 0.0, %v711
        %v713 = vpop.f32.mrb[0].mxu0
        %v714 = vpop.f32.mrb[0].mxu0
        %v715 = vadd.f32 0.0, %v714
        %v716 = vpop.f32.mrb[0].mxu0
        %717 = vdwg.mxu0
        %v734 = vunpack.c.l.b16 %v493
        %v735 = vunpack.c.l.b16 %v494
        %v736 = vunpack.c.l.b16 %v495
        %v737 = vunpack.c.l.b16 %v496
        %v738 = vunpack.c.l.b16 %v497
        %v739 = vunpack.c.l.b16 %v498
        %v740 = vunpack.c.l.b16 %v499
        %v741 = vunpack.c.l.b16 %v500
        %v742 = vunpack.c.l.b16 %v501
        %v743 = vunpack.c.l.b16 %v502
        %v744 = vunpack.c.l.b16 %v503
        %v745 = vunpack.c.l.b16 %v504
        %v746 = vunpack.c.l.b16 %v505
        %v747 = vunpack.c.l.b16 %v506
        %v748 = vunpack.c.l.b16 %v507
        %v749 = vunpack.c.l.b16 %v508
        %v750 = vpack.c.b16 %v735, %v734
        %v751 = vpack.c.b16 %v737, %v736
        %v752 = vpack.c.b16 %v739, %v738
        %v753 = vpack.c.b16 %v741, %v740
        %v754 = vpack.c.b16 %v743, %v742
        %v755 = vpack.c.b16 %v745, %v744
        %v756 = vpack.c.b16 %v747, %v746
        %v757 = vpack.c.b16 %v749, %v748
        %766 = vmatprep.subr.bf16.mxu0 0
        %767 = vmatpush1.bf16.msra.mxu0 %v750
        %768 = vmatprep.subr.bf16.mxu0 0
        %769 = vmatpush1.bf16.msra.mxu0 %v751
        %770 = vmatprep.subr.bf16.mxu0 0
        %771 = vmatpush1.bf16.msra.mxu0 %v752
        %772 = vmatprep.subr.bf16.mxu0 0
        %773 = vmatpush1.bf16.msra.mxu0 %v753
        %774 = vmatprep.subr.bf16.mxu0 0
        %775 = vmatpush1.bf16.msra.mxu0 %v754
        %776 = vmatprep.subr.bf16.mxu0 0
        %777 = vmatpush1.bf16.msra.mxu0 %v755
        %778 = vmatprep.subr.bf16.mxu0 0
        %779 = vmatpush1.bf16.msra.mxu0 %v756
        %780 = vmatprep.subr.bf16.mxu0 0
        %781 = vmatpush1.bf16.msra.mxu0 %v757
        %782 = vmatprep.subr.bf16.mxu0 0
        %783 = vmatpush1.bf16.msra.mxu0 0
        %784 = vmatprep.subr.bf16.mxu0 0
        %785 = vmatpush1.bf16.msra.mxu0 0
        %786 = vmatprep.subr.bf16.mxu0 0
        %787 = vmatpush1.bf16.msra.mxu0 0
        %788 = vmatprep.subr.bf16.mxu0 0
        %789 = vmatpush1.bf16.msra.mxu0 0
        %790 = vmatprep.subr.bf16.mxu0 0
        %791 = vmatpush1.bf16.msra.mxu0 0
        %792 = vmatprep.subr.bf16.mxu0 0
        %793 = vmatpush1.bf16.msra.mxu0 0
        %794 = vmatprep.subr.bf16.mxu0 0
        %795 = vmatpush1.bf16.msra.mxu0 0
        %796 = vmatprep.subr.bf16.mxu0 0
        %797 = vmatpush1.bf16.msra.mxu0 0
        %798 = vmatprep.mubr.bf16.mxu0 0
        %799 = vmatmul.mubr.bf16.gmra.mrb[0].mxu0 %v469
        %v800 = vpop.f32.mrb[0].mxu0
        %v801 = vadd.f32 %v656, %v800
        %v802 = vpop.f32.mrb[0].mxu0
        %v803 = vpop.f32.mrb[0].mxu0
        %v804 = vadd.f32 %v659, %v803
        %v805 = vpop.f32.mrb[0].mxu0
        %806 = vmatprep.mubr.bf16.mxu0 0
        %807 = vmatmul.mubr.bf16.gmra.mrb[0].mxu0 %v470
        %v808 = vpop.f32.mrb[0].mxu0
        %v809 = vadd.f32 %v664, %v808
        %v810 = vpop.f32.mrb[0].mxu0
        %v811 = vpop.f32.mrb[0].mxu0
        %v812 = vadd.f32 %v667, %v811
        %v813 = vpop.f32.mrb[0].mxu0
        %814 = vmatprep.mubr.bf16.mxu0 0
        %815 = vmatmul.mubr.bf16.gmra.mrb[0].mxu0 %v471
        %v816 = vpop.f32.mrb[0].mxu0
        %v817 = vadd.f32 %v672, %v816
        %v818 = vpop.f32.mrb[0].mxu0
        %v819 = vpop.f32.mrb[0].mxu0
        %v820 = vadd.f32 %v675, %v819
        %v821 = vpop.f32.mrb[0].mxu0
        %822 = vmatprep.mubr.bf16.mxu0 0
        %823 = vmatmul.mubr.bf16.gmra.mrb[0].mxu0 %v472
        %v824 = vpop.f32.mrb[0].mxu0
        %v825 = vadd.f32 %v680, %v824
        %v826 = vpop.f32.mrb[0].mxu0
        %v827 = vpop.f32.mrb[0].mxu0
        %v828 = vadd.f32 %v683, %v827
        %v829 = vpop.f32.mrb[0].mxu0
        %830 = vmatprep.mubr.bf16.mxu0 0
        %831 = vmatmul.mubr.bf16.gmra.mrb[0].mxu0 %v473
        %v832 = vpop.f32.mrb[0].mxu0
        %v833 = vadd.f32 %v688, %v832
        %v834 = vpop.f32.mrb[0].mxu0
        %v835 = vpop.f32.mrb[0].mxu0
        %v836 = vadd.f32 %v691, %v835
        %v837 = vpop.f32.mrb[0].mxu0
        %838 = vmatprep.mubr.bf16.mxu0 0
        %839 = vmatmul.mubr.bf16.gmra.mrb[0].mxu0 %v474
        %v840 = vpop.f32.mrb[0].mxu0
        %v841 = vadd.f32 %v696, %v840
        %v842 = vpop.f32.mrb[0].mxu0
        %v843 = vpop.f32.mrb[0].mxu0
        %v844 = vadd.f32 %v699, %v843
        %v845 = vpop.f32.mrb[0].mxu0
        %846 = vmatprep.mubr.bf16.mxu0 0
        %847 = vmatmul.mubr.bf16.gmra.mrb[0].mxu0 %v475
        %v848 = vpop.f32.mrb[0].mxu0
        %v849 = vadd.f32 %v704, %v848
        %v850 = vpop.f32.mrb[0].mxu0
        %v851 = vpop.f32.mrb[0].mxu0
        %v852 = vadd.f32 %v707, %v851
        %v853 = vpop.f32.mrb[0].mxu0
        %854 = vmatprep.mubr.bf16.mxu0 0
        %855 = vmatmul.mubr.bf16.gmra.mrb[0].mxu0 %v476
        %v856 = vpop.f32.mrb[0].mxu0
        %v857 = vadd.f32 %v712, %v856
        %v858 = vpop.f32.mrb[0].mxu0
        %v859 = vpop.f32.mrb[0].mxu0
        %v860 = vadd.f32 %v715, %v859
        %v861 = vpop.f32.mrb[0].mxu0
        %862 = vdwg.mxu0
        %v863 = vld [vmem:[%s4] sm:$0x1]
        %v865 = vlaneseq
        %v866 = vshrl.u32 %v865, 7
        %v867 = vsub.s32 0, %v866
        %v868 = vrot.slane %v863, %v867
        %v870 = vadd.f32 %v801, %v868
        %v871 = vadd.f32 %v804, %v868
        %v872 = vadd.f32 %v809, %v868
        %v873 = vadd.f32 %v812, %v868
        %v874 = vadd.f32 %v817, %v868
        %v875 = vadd.f32 %v820, %v868
        %v876 = vadd.f32 %v825, %v868
        %v877 = vadd.f32 %v828, %v868
        %v878 = vadd.f32 %v833, %v868
        %v879 = vadd.f32 %v836, %v868
        %v880 = vadd.f32 %v841, %v868
        %v881 = vadd.f32 %v844, %v868
        %v882 = vadd.f32 %v849, %v868
        %v883 = vadd.f32 %v852, %v868
        %v884 = vadd.f32 %v857, %v868
        %v885 = vadd.f32 %v860, %v868
        %v886 = vmax.f32 %v870, 0.0
        %v887 = vmax.f32 %v871, 0.0
        %v888 = vmax.f32 %v872, 0.0
        %v889 = vmax.f32 %v873, 0.0
        %v890 = vmax.f32 %v874, 0.0
        %v891 = vmax.f32 %v875, 0.0
        %v892 = vmax.f32 %v876, 0.0
        %v893 = vmax.f32 %v877, 0.0
        %v894 = vmax.f32 %v878, 0.0
        %v895 = vmax.f32 %v879, 0.0
        %v896 = vmax.f32 %v880, 0.0
        %v897 = vmax.f32 %v881, 0.0
        %v898 = vmax.f32 %v882, 0.0
        %v899 = vmax.f32 %v883, 0.0
        %v900 = vmax.f32 %v884, 0.0
        %v901 = vmax.f32 %v885, 0.0
        %v902 = vpack.c.bf16 %v887, %v886
        %v903 = vpack.c.bf16 %v889, %v888
        %v904 = vpack.c.bf16 %v891, %v890
        %v905 = vpack.c.bf16 %v893, %v892
        %v906 = vpack.c.bf16 %v895, %v894
        %v907 = vpack.c.bf16 %v897, %v896
        %v908 = vpack.c.bf16 %v899, %v898
        %v909 = vpack.c.bf16 %v901, %v900
        %v910 = vld [vmem:[#allocation10] sm:$0xf]
        %v911 = vld [vmem:[#allocation10 + $0x4] sm:$0xf]
        %v912 = vld [vmem:[#allocation10 + $0x8] sm:$0xf]
        %v913 = vld [vmem:[#allocation10 + $0xc] sm:$0xf]
        %v914 = vld [vmem:[#allocation10 + $0x10] sm:$0xf]
        %v915 = vld [vmem:[#allocation10 + $0x14] sm:$0xf]
        %v916 = vld [vmem:[#allocation10 + $0x18] sm:$0xf]
        %v917 = vld [vmem:[#allocation10 + $0x1c] sm:$0xf]
        %v918 = vld [vmem:[#allocation10 + $0x20] sm:$0xf]
        %v919 = vld [vmem:[#allocation10 + $0x24] sm:$0xf]
        %v920 = vld [vmem:[#allocation10 + $0x28] sm:$0xf]
        %v921 = vld [vmem:[#allocation10 + $0x2c] sm:$0xf]
        %v922 = vld [vmem:[#allocation10 + $0x30] sm:$0xf]
        %v923 = vld [vmem:[#allocation10 + $0x34] sm:$0xf]
        %v924 = vld [vmem:[#allocation10 + $0x38] sm:$0xf]
        %v925 = vld [vmem:[#allocation10 + $0x3c] sm:$0xf]
        %v926 = vld [vmem:[%s6] sm:$0x1]
        %v928 = vlaneseq
        %v929 = vshrl.u32 %v928, 7
        %v930 = vsub.s32 0, %v929
        %v931 = vrot.slane %v926, %v930
        %v949 = vunpack.c.l.b16 %v910
        %v950 = vunpack.c.l.b16 %v911
        %v951 = vunpack.c.l.b16 %v912
        %v952 = vunpack.c.l.b16 %v913
        %v953 = vunpack.c.l.b16 %v914
        %v954 = vunpack.c.l.b16 %v915
        %v955 = vunpack.c.l.b16 %v916
        %v956 = vunpack.c.l.b16 %v917
        %v957 = vunpack.c.l.b16 %v918
        %v958 = vunpack.c.l.b16 %v919
        %v959 = vunpack.c.l.b16 %v920
        %v960 = vunpack.c.l.b16 %v921
        %v961 = vunpack.c.l.b16 %v922
        %v962 = vunpack.c.l.b16 %v923
        %v963 = vunpack.c.l.b16 %v924
        %v964 = vunpack.c.l.b16 %v925
        %v965 = vpack.c.b16 %v950, %v949
        %v966 = vpack.c.b16 %v952, %v951
        %v967 = vpack.c.b16 %v954, %v953
        %v968 = vpack.c.b16 %v956, %v955
        %v969 = vpack.c.b16 %v958, %v957
        %v970 = vpack.c.b16 %v960, %v959
        %v971 = vpack.c.b16 %v962, %v961
        %v972 = vpack.c.b16 %v964, %v963
        %981 = vmatprep.subr.bf16.mxu0 0
        %982 = vmatpush1.bf16.msra.mxu0 %v965
        %983 = vmatprep.subr.bf16.mxu0 0
        %984 = vmatpush1.bf16.msra.mxu0 %v966
        %985 = vmatprep.subr.bf16.mxu0 0
        %986 = vmatpush1.bf16.msra.mxu0 %v967
        %987 = vmatprep.subr.bf16.mxu0 0
        %988 = vmatpush1.bf16.msra.mxu0 %v968
        %989 = vmatprep.subr.bf16.mxu0 0
        %990 = vmatpush1.bf16.msra.mxu0 %v969
        %991 = vmatprep.subr.bf16.mxu0 0
        %992 = vmatpush1.bf16.msra.mxu0 %v970
        %993 = vmatprep.subr.bf16.mxu0 0
        %994 = vmatpush1.bf16.msra.mxu0 %v971
        %995 = vmatprep.subr.bf16.mxu0 0
        %996 = vmatpush1.bf16.msra.mxu0 %v972
        %997 = vmatprep.subr.bf16.mxu0 0
        %998 = vmatpush1.bf16.msra.mxu0 0
        %999 = vmatprep.subr.bf16.mxu0 0
        %1000 = vmatpush1.bf16.msra.mxu0 0
        %1001 = vmatprep.subr.bf16.mxu0 0
        %1002 = vmatpush1.bf16.msra.mxu0 0
        %1003 = vmatprep.subr.bf16.mxu0 0
        %1004 = vmatpush1.bf16.msra.mxu0 0
        %1005 = vmatprep.subr.bf16.mxu0 0
        %1006 = vmatpush1.bf16.msra.mxu0 0
        %1007 = vmatprep.subr.bf16.mxu0 0
        %1008 = vmatpush1.bf16.msra.mxu0 0
        %1009 = vmatprep.subr.bf16.mxu0 0
        %1010 = vmatpush1.bf16.msra.mxu0 0
        %1011 = vmatprep.subr.bf16.mxu0 0
        %1012 = vmatpush1.bf16.msra.mxu0 0
        %1013 = vmatprep.mubr.bf16.mxu0 0
        %1014 = vmatmul.mubr.bf16.gmra.mrb[0].mxu0 %v902
        %v1015 = vpop.f32.mrb[0].mxu0
        %v1016 = vadd.f32 %v931, %v1015
        %v1017 = vpop.f32.mrb[0].mxu0
        %v1018 = vpop.f32.mrb[0].mxu0
        %v1019 = vadd.f32 %v931, %v1018
        %v1020 = vpop.f32.mrb[0].mxu0
        %1021 = vmatprep.mubr.bf16.mxu0 0
        %1022 = vmatmul.mubr.bf16.gmra.mrb[0].mxu0 %v903
        %v1023 = vpop.f32.mrb[0].mxu0
        %v1024 = vadd.f32 %v931, %v1023
        %v1025 = vpop.f32.mrb[0].mxu0
        %v1026 = vpop.f32.mrb[0].mxu0
        %v1027 = vadd.f32 %v931, %v1026
        %v1028 = vpop.f32.mrb[0].mxu0
        %1029 = vmatprep.mubr.bf16.mxu0 0
        %1030 = vmatmul.mubr.bf16.gmra.mrb[0].mxu0 %v904
        %v1031 = vpop.f32.mrb[0].mxu0
        %v1032 = vadd.f32 %v931, %v1031
        %v1033 = vpop.f32.mrb[0].mxu0
        %v1034 = vpop.f32.mrb[0].mxu0
        %v1035 = vadd.f32 %v931, %v1034
        %v1036 = vpop.f32.mrb[0].mxu0
        %1037 = vmatprep.mubr.bf16.mxu0 0
        %1038 = vmatmul.mubr.bf16.gmra.mrb[0].mxu0 %v905
        %v1039 = vpop.f32.mrb[0].mxu0
        %v1040 = vadd.f32 %v931, %v1039
        %v1041 = vpop.f32.mrb[0].mxu0
        %v1042 = vpop.f32.mrb[0].mxu0
        %v1043 = vadd.f32 %v931, %v1042
        %v1044 = vpop.f32.mrb[0].mxu0
        %1045 = vmatprep.mubr.bf16.mxu0 0
        %1046 = vmatmul.mubr.bf16.gmra.mrb[0].mxu0 %v906
        %v1047 = vpop.f32.mrb[0].mxu0
        %v1048 = vadd.f32 %v931, %v1047
        %v1049 = vpop.f32.mrb[0].mxu0
        %v1050 = vpop.f32.mrb[0].mxu0
        %v1051 = vadd.f32 %v931, %v1050
        %v1052 = vpop.f32.mrb[0].mxu0
        %1053 = vmatprep.mubr.bf16.mxu0 0
        %1054 = vmatmul.mubr.bf16.gmra.mrb[0].mxu0 %v907
        %v1055 = vpop.f32.mrb[0].mxu0
        %v1056 = vadd.f32 %v931, %v1055
        %v1057 = vpop.f32.mrb[0].mxu0
        %v1058 = vpop.f32.mrb[0].mxu0
        %v1059 = vadd.f32 %v931, %v1058
        %v1060 = vpop.f32.mrb[0].mxu0
        %1061 = vmatprep.mubr.bf16.mxu0 0
        %1062 = vmatmul.mubr.bf16.gmra.mrb[0].mxu0 %v908
        %v1063 = vpop.f32.mrb[0].mxu0
        %v1064 = vadd.f32 %v931, %v1063
        %v1065 = vpop.f32.mrb[0].mxu0
        %v1066 = vpop.f32.mrb[0].mxu0
        %v1067 = vadd.f32 %v931, %v1066
        %v1068 = vpop.f32.mrb[0].mxu0
        %1069 = vmatprep.mubr.bf16.mxu0 0
        %1070 = vmatmul.mubr.bf16.gmra.mrb[0].mxu0 %v909
        %v1071 = vpop.f32.mrb[0].mxu0
        %v1072 = vadd.f32 %v931, %v1071
        %v1073 = vpop.f32.mrb[0].mxu0
        %v1074 = vpop.f32.mrb[0].mxu0
        %v1075 = vadd.f32 %v931, %v1074
        %v1076 = vpop.f32.mrb[0].mxu0
        %1077 = vdwg.mxu0
        %v1078 = vmax.f32 %v1016, 0.0
        %v1079 = vmax.f32 %v1019, 0.0
        %v1080 = vmax.f32 %v1024, 0.0
        %v1081 = vmax.f32 %v1027, 0.0
        %v1082 = vmax.f32 %v1032, 0.0
        %v1083 = vmax.f32 %v1035, 0.0
        %v1084 = vmax.f32 %v1040, 0.0
        %v1085 = vmax.f32 %v1043, 0.0
        %v1086 = vmax.f32 %v1048, 0.0
        %v1087 = vmax.f32 %v1051, 0.0
        %v1088 = vmax.f32 %v1056, 0.0
        %v1089 = vmax.f32 %v1059, 0.0
        %v1090 = vmax.f32 %v1064, 0.0
        %v1091 = vmax.f32 %v1067, 0.0
        %v1092 = vmax.f32 %v1072, 0.0
        %v1093 = vmax.f32 %v1075, 0.0
        %v1094 = vpack.c.bf16 %v1079, %v1078
        %v1095 = vpack.c.bf16 %v1081, %v1080
        %v1096 = vpack.c.bf16 %v1083, %v1082
        %v1097 = vpack.c.bf16 %v1085, %v1084
        %v1098 = vpack.c.bf16 %v1087, %v1086
        %v1099 = vpack.c.bf16 %v1089, %v1088
        %v1100 = vpack.c.bf16 %v1091, %v1090
        %v1101 = vpack.c.bf16 %v1093, %v1092
        %v1102 = vld [vmem:[#allocation11] sm:$0xf]
        %v1103 = vld [vmem:[#allocation11 + $0x4] sm:$0xf]
        %v1104 = vld [vmem:[#allocation11 + $0x8] sm:$0xf]
        %v1105 = vld [vmem:[#allocation11 + $0xc] sm:$0xf]
        %v1106 = vld [vmem:[#allocation11 + $0x10] sm:$0xf]
        %v1107 = vld [vmem:[#allocation11 + $0x14] sm:$0xf]
        %v1108 = vld [vmem:[#allocation11 + $0x18] sm:$0xf]
        %v1109 = vld [vmem:[#allocation11 + $0x1c] sm:$0xf]
        %v1110 = vld [vmem:[#allocation11 + $0x20] sm:$0xf]
        %v1111 = vld [vmem:[#allocation11 + $0x24] sm:$0xf]
        %v1112 = vld [vmem:[#allocation11 + $0x28] sm:$0xf]
        %v1113 = vld [vmem:[#allocation11 + $0x2c] sm:$0xf]
        %v1114 = vld [vmem:[#allocation11 + $0x30] sm:$0xf]
        %v1115 = vld [vmem:[#allocation11 + $0x34] sm:$0xf]
        %v1116 = vld [vmem:[#allocation11 + $0x38] sm:$0xf]
        %v1117 = vld [vmem:[#allocation11 + $0x3c] sm:$0xf]
        %v1118 = vld [vmem:[%s8] sm:$0x1]
        %v1120 = vlaneseq
        %v1121 = vshrl.u32 %v1120, 7
        %v1122 = vsub.s32 0, %v1121
        %v1123 = vrot.slane %v1118, %v1122
        %v1141 = vunpack.c.l.b16 %v1102
        %v1142 = vunpack.c.l.b16 %v1103
        %v1143 = vunpack.c.l.b16 %v1104
        %v1144 = vunpack.c.l.b16 %v1105
        %v1145 = vunpack.c.l.b16 %v1106
        %v1146 = vunpack.c.l.b16 %v1107
        %v1147 = vunpack.c.l.b16 %v1108
        %v1148 = vunpack.c.l.b16 %v1109
        %v1149 = vunpack.c.l.b16 %v1110
        %v1150 = vunpack.c.l.b16 %v1111
        %v1151 = vunpack.c.l.b16 %v1112
        %v1152 = vunpack.c.l.b16 %v1113
        %v1153 = vunpack.c.l.b16 %v1114
        %v1154 = vunpack.c.l.b16 %v1115
        %v1155 = vunpack.c.l.b16 %v1116
        %v1156 = vunpack.c.l.b16 %v1117
        %v1157 = vpack.c.b16 %v1142, %v1141
        %v1158 = vpack.c.b16 %v1144, %v1143
        %v1159 = vpack.c.b16 %v1146, %v1145
        %v1160 = vpack.c.b16 %v1148, %v1147
        %v1161 = vpack.c.b16 %v1150, %v1149
        %v1162 = vpack.c.b16 %v1152, %v1151
        %v1163 = vpack.c.b16 %v1154, %v1153
        %v1164 = vpack.c.b16 %v1156, %v1155
        %1173 = vmatprep.subr.bf16.mxu0 0
        %1174 = vmatpush1.bf16.msra.mxu0 %v1157
        %1175 = vmatprep.subr.bf16.mxu0 0
        %1176 = vmatpush1.bf16.msra.mxu0 %v1158
        %1177 = vmatprep.subr.bf16.mxu0 0
        %1178 = vmatpush1.bf16.msra.mxu0 %v1159
        %1179 = vmatprep.subr.bf16.mxu0 0
        %1180 = vmatpush1.bf16.msra.mxu0 %v1160
        %1181 = vmatprep.subr.bf16.mxu0 0
        %1182 = vmatpush1.bf16.msra.mxu0 %v1161
        %1183 = vmatprep.subr.bf16.mxu0 0
        %1184 = vmatpush1.bf16.msra.mxu0 %v1162
        %1185 = vmatprep.subr.bf16.mxu0 0
        %1186 = vmatpush1.bf16.msra.mxu0 %v1163
        %1187 = vmatprep.subr.bf16.mxu0 0
        %1188 = vmatpush1.bf16.msra.mxu0 %v1164
        %1189 = vmatprep.subr.bf16.mxu0 0
        %1190 = vmatpush1.bf16.msra.mxu0 0
        %1191 = vmatprep.subr.bf16.mxu0 0
        %1192 = vmatpush1.bf16.msra.mxu0 0
        %1193 = vmatprep.subr.bf16.mxu0 0
        %1194 = vmatpush1.bf16.msra.mxu0 0
        %1195 = vmatprep.subr.bf16.mxu0 0
        %1196 = vmatpush1.bf16.msra.mxu0 0
        %1197 = vmatprep.subr.bf16.mxu0 0
        %1198 = vmatpush1.bf16.msra.mxu0 0
        %1199 = vmatprep.subr.bf16.mxu0 0
        %1200 = vmatpush1.bf16.msra.mxu0 0
        %1201 = vmatprep.subr.bf16.mxu0 0
        %1202 = vmatpush1.bf16.msra.mxu0 0
        %1203 = vmatprep.subr.bf16.mxu0 0
        %1204 = vmatpush1.bf16.msra.mxu0 0
        %1205 = vmatprep.mubr.bf16.mxu0 0
        %1206 = vmatmul.mubr.bf16.gmra.mrb[0].mxu0 %v1094
        %v1207 = vpop.f32.mrb[0].mxu0
        %v1208 = vadd.f32 %v1123, %v1207
        %v1209 = vpop.f32.mrb[0].mxu0
        %v1210 = vpop.f32.mrb[0].mxu0
        %v1211 = vadd.f32 %v1123, %v1210
        %v1212 = vpop.f32.mrb[0].mxu0
        %1213 = vmatprep.mubr.bf16.mxu0 0
        %1214 = vmatmul.mubr.bf16.gmra.mrb[0].mxu0 %v1095
        %v1215 = vpop.f32.mrb[0].mxu0
        %v1216 = vadd.f32 %v1123, %v1215
        %v1217 = vpop.f32.mrb[0].mxu0
        %v1218 = vpop.f32.mrb[0].mxu0
        %v1219 = vadd.f32 %v1123, %v1218
        %v1220 = vpop.f32.mrb[0].mxu0
        %1221 = vmatprep.mubr.bf16.mxu0 0
        %1222 = vmatmul.mubr.bf16.gmra.mrb[0].mxu0 %v1096
        %v1223 = vpop.f32.mrb[0].mxu0
        %v1224 = vadd.f32 %v1123, %v1223
        %v1225 = vpop.f32.mrb[0].mxu0
        %v1226 = vpop.f32.mrb[0].mxu0
        %v1227 = vadd.f32 %v1123, %v1226
        %v1228 = vpop.f32.mrb[0].mxu0
        %1229 = vmatprep.mubr.bf16.mxu0 0
        %1230 = vmatmul.mubr.bf16.gmra.mrb[0].mxu0 %v1097
        %v1231 = vpop.f32.mrb[0].mxu0
        %v1232 = vadd.f32 %v1123, %v1231
        %v1233 = vpop.f32.mrb[0].mxu0
        %v1234 = vpop.f32.mrb[0].mxu0
        %v1235 = vadd.f32 %v1123, %v1234
        %v1236 = vpop.f32.mrb[0].mxu0
        %1237 = vmatprep.mubr.bf16.mxu0 0
        %1238 = vmatmul.mubr.bf16.gmra.mrb[0].mxu0 %v1098
        %v1239 = vpop.f32.mrb[0].mxu0
        %v1240 = vadd.f32 %v1123, %v1239
        %v1241 = vpop.f32.mrb[0].mxu0
        %v1242 = vpop.f32.mrb[0].mxu0
        %v1243 = vadd.f32 %v1123, %v1242
        %v1244 = vpop.f32.mrb[0].mxu0
        %1245 = vmatprep.mubr.bf16.mxu0 0
        %1246 = vmatmul.mubr.bf16.gmra.mrb[0].mxu0 %v1099
        %v1247 = vpop.f32.mrb[0].mxu0
        %v1248 = vadd.f32 %v1123, %v1247
        %v1249 = vpop.f32.mrb[0].mxu0
        %v1250 = vpop.f32.mrb[0].mxu0
        %v1251 = vadd.f32 %v1123, %v1250
        %v1252 = vpop.f32.mrb[0].mxu0
        %1253 = vmatprep.mubr.bf16.mxu0 0
        %1254 = vmatmul.mubr.bf16.gmra.mrb[0].mxu0 %v1100
        %v1255 = vpop.f32.mrb[0].mxu0
        %v1256 = vadd.f32 %v1123, %v1255
        %v1257 = vpop.f32.mrb[0].mxu0
        %v1258 = vpop.f32.mrb[0].mxu0
        %v1259 = vadd.f32 %v1123, %v1258
        %v1260 = vpop.f32.mrb[0].mxu0
        %1261 = vmatprep.mubr.bf16.mxu0 0
        %1262 = vmatmul.mubr.bf16.gmra.mrb[0].mxu0 %v1101
        %v1263 = vpop.f32.mrb[0].mxu0
        %v1264 = vadd.f32 %v1123, %v1263
        %v1265 = vpop.f32.mrb[0].mxu0
        %v1266 = vpop.f32.mrb[0].mxu0
        %v1267 = vadd.f32 %v1123, %v1266
        %v1268 = vpop.f32.mrb[0].mxu0
        %1269 = vdwg.mxu0
        %v1270 = vadd.f32 %v1208, %v453
        %v1271 = vadd.f32 %v1211, %v454
        %v1272 = vadd.f32 %v1216, %v455
        %v1273 = vadd.f32 %v1219, %v456
        %v1274 = vadd.f32 %v1224, %v457
        %v1275 = vadd.f32 %v1227, %v458
        %v1276 = vadd.f32 %v1232, %v459
        %v1277 = vadd.f32 %v1235, %v460
        %v1278 = vadd.f32 %v1240, %v461
        %v1279 = vadd.f32 %v1243, %v462
        %v1280 = vadd.f32 %v1248, %v463
        %v1281 = vadd.f32 %v1251, %v464
        %v1282 = vadd.f32 %v1256, %v465
        %v1283 = vadd.f32 %v1259, %v466
        %v1284 = vadd.f32 %v1264, %v467
        %v1285 = vadd.f32 %v1267, %v468
        %1286 = vst [vmem:[%s448] sm:$0xff] %v1270
        %1287 = vst [vmem:[%s448 + $0x8] sm:$0xff] %v1271
        %1288 = vst [vmem:[%s448 + $0x10] sm:$0xff] %v1272
        %1289 = vst [vmem:[%s448 + $0x18] sm:$0xff] %v1273
        %1290 = vst [vmem:[%s448 + $0x20] sm:$0xff] %v1274
        %1291 = vst [vmem:[%s448 + $0x28] sm:$0xff] %v1275
        %1292 = vst [vmem:[%s448 + $0x30] sm:$0xff] %v1276
        %1293 = vst [vmem:[%s448 + $0x38] sm:$0xff] %v1277
        %1294 = vst [vmem:[%s448 + $0x40] sm:$0xff] %v1278
        %1295 = vst [vmem:[%s448 + $0x48] sm:$0xff] %v1279
        %1296 = vst [vmem:[%s448 + $0x50] sm:$0xff] %v1280
        %1297 = vst [vmem:[%s448 + $0x58] sm:$0xff] %v1281
        %1298 = vst [vmem:[%s448 + $0x60] sm:$0xff] %v1282
        %1299 = vst [vmem:[%s448 + $0x68] sm:$0xff] %v1283
        %1300 = vst [vmem:[%s448 + $0x70] sm:$0xff] %v1284
        %1301 = vst [vmem:[%s448 + $0x78] sm:$0xff] %v1285
        %s1302 = sand.u32 %s238, 1
        %s1303 = scalar_lea.sflag [#allocation4], %s1302
        %s1304 = sand.u32 %s238, 1
        %s1305 = smul.addr %s1304, 128
        %s1306 = scalar_lea.vmem [#allocation13], %s1305
        // Predicated region
        $region81: #{tpu_custom_call.1} parent=55 // pred_check
          %p1307 = pneg %p248
        $region82: #{tpu_custom_call.1} parent=55 // pred_check_branch
          %1309 = sbr.rel (%p1307) target = $region84
        $region83: #{tpu_custom_call.1} parent=55 // pred_region
          %s1310 = smul.u32 16, %s31
          %s1312 = ssub.s32 2048, 2048
          %1313 = vsyncadd %s1303, %s1312
          %s1314 = smul.addr %s1310, 128
          %s1315 = scalar_lea.hbm %s9, %s1314
          %s1316 = sshll.u32 %s1306, 4
          %s1317 = int_to_ptr.vmem [resolvable:$true] %s1316
          %1322 = dma.vmem_to_hbm [thread:$0]  %s1317, 2048, %s1315, %s1303, 128, 128, 8
        $region84: #{tpu_custom_call.1} parent=55 // pred_fallthru
          _
      $region56: #{tpu_custom_call.1} parent=5 // pred_fallthru
        _
      %p1323 = scmp.le.s32.totalorder 2, %s26
      // Predicated region
      $region85: #{tpu_custom_call.1} parent=5 // pred_check
        %p1324 = pneg %p1323
      $region86: #{tpu_custom_call.1} parent=5 // pred_check_branch
        %1326 = sbr.rel (%p1324) target = $region88
      $region87: #{tpu_custom_call.1} parent=5 // pred_region
        %s1327 = ssub.s32 %s26, 2
        // Predicated region
        $region89: #{tpu_custom_call.1} parent=87 // pred_check
          %p1328 = pneg %p254
        $region90: #{tpu_custom_call.1} parent=87 // pred_check_branch
          %1330 = sbr.rel (%p1328) target = $region92
        $region91: #{tpu_custom_call.1} parent=87 // pred_region
          %s1331 = sand.u32 %s239, 1
          %s1332 = scalar_lea.sflag [#allocation4], %s1331
          %s1333 = sand.u32 %s239, 1
          %s1334 = smul.addr %s1333, 128
          %s1335 = scalar_lea.vmem [#allocation13], %s1334
          %1336 = dma.done %s1332, 2048
        $region92: #{tpu_custom_call.1} parent=87 // pred_fallthru
          _
      $region88: #{tpu_custom_call.1} parent=5 // pred_fallthru
        _
    $region6: #{tpu_custom_call.1} parent=1 // loop_footer
      %s30 = sadd.s32 1, %s26
    $region7: #{tpu_custom_call.1} parent=1 // loop_footer_branch
      %25 = sbr.rel target = $region3
    $region8: #{tpu_custom_call.1} parent=1 // loop_exit
      _
    %1337 = vsyncpa [#allocation3], 1
    %s1338 = scalar_lea.sflag [#allocation3], 1
    %1339 = vsyncpa %s1338, 1
    %1340 = vsyncpa [#allocation6], 1
    %s1341 = scalar_lea.sflag [#allocation6], 1
    %1342 = vsyncpa %s1341, 1
    %1343 = vsyncpa [#allocation9], 1
    %1344 = vsyncpa [#allocation12], 1
    %1345 = vsyncpa [#allocation4], 1
    %s1346 = scalar_lea.sflag [#allocation4], 1
    %1347 = vsyncpa %s1346, 1

</llo_original>
